<compile_context>
chip_gen: v6e
topology: v6e:2x2x1
jax: 0.10.0
libtpu: 0.0.40
codegen_flags: <defaults>
</compile_context>

<pallas_src>
import jax
import jax.numpy as jnp
from jax.experimental import pallas as pl
from jax.experimental.pallas import tpu as pltpu

_SUBLANES = 8  # f32 sublanes per vreg


def _channel_pool_kernel(x_ref, o_ref):
    # x_ref: (1, C, TS) block in VMEM (C -> sublanes, TS -> lanes)
    # o_ref: (1, 1, TS) block
    C = x_ref.shape[1]

    if C <= _SUBLANES:
        x = x_ref[0, :, :].astype(jnp.float32)                  # (C, TS)
        s = jnp.sum(x, axis=0, keepdims=True)                   # (1, TS)
        m = jnp.max(x, axis=0, keepdims=True)
    else:
        # Stage 1 (VPU, single pass): fold channels in groups of 8; each group
        # is read from VMEM once and feeds both the running sum and max.
        n_full = C // _SUBLANES
        acc_s = x_ref[0, 0:_SUBLANES, :].astype(jnp.float32)    # (8, TS)
        acc_m = acc_s
        for g in range(1, n_full):                              # static unroll
            xg = x_ref[0, g * _SUBLANES:(g + 1) * _SUBLANES, :].astype(jnp.float32)
            acc_s = acc_s + xg
            acc_m = jnp.maximum(acc_m, xg)
        # Stage 2 (XLU, once per block): collapse the 8 sublanes.
        s = jnp.sum(acc_s, axis=0, keepdims=True)               # (1, TS)
        m = jnp.max(acc_m, axis=0, keepdims=True)
        rem = C - n_full * _SUBLANES
        if rem:
            xr = x_ref[0, n_full * _SUBLANES:C, :].astype(jnp.float32)
            s = s + jnp.sum(xr, axis=0, keepdims=True)
            m = jnp.maximum(m, jnp.max(xr, axis=0, keepdims=True))

    o_ref[0] = (s * (1.0 / C) + m).astype(o_ref.dtype)


def _pick_spatial_tile(hw, c, itemsize, target_block_bytes):
    """Lane-dense spatial tile: multiple of 128, divides HW, ~target bytes."""
    if hw % 128 == 0 and hw > 128:
        ts = (target_block_bytes // (c * itemsize)) // 128 * 128
        ts = max(128, min(hw, ts))
        while hw % ts != 0:      # terminates: 128 always divides hw here
            ts -= 128
        return ts
    # HW not a multiple of 128: block equals the full flattened spatial dim
    # (always a legal BlockSpec; suboptimal only for very large odd HW).
    return hw


def channel_pool(x, *, target_block_bytes=2 << 20):
    """x: (N, C, H, W) -> (N, 1, H, W); mean+max over the channel axis."""
    N, C, H, W = x.shape
    HW = H * W
    itemsize = jnp.dtype(x.dtype).itemsize

    xf = x.reshape(N, C, HW)                 # lane-dense layout; free reshape
    ts = _pick_spatial_tile(HW, C, itemsize, target_block_bytes)
    n_spatial = HW // ts

    out_flat = pl.pallas_call(
        _channel_pool_kernel,
        out_shape=jax.ShapeDtypeStruct((N, 1, HW), x.dtype),
        grid_spec=pltpu.PrefetchScalarGridSpec(
            num_scalar_prefetch=0,
            grid=(N, n_spatial),
            in_specs=[pl.BlockSpec((1, C, ts), lambda n, s: (n, 0, s))],
            out_specs=pl.BlockSpec((1, 1, ts), lambda n, s: (n, 0, s)),
        ),
        compiler_params=pltpu.CompilerParams(
            dimension_semantics=("parallel", "parallel"),
        ),
    )(xf)
    return out_flat.reshape(N, 1, H, W)


def channel_pool_ref(x):
    # Pure-JAX reference matching the PyTorch forward.
    return jnp.mean(x, axis=1, keepdims=True) + jnp.max(x, axis=1, keepdims=True)


if __name__ == "__main__":
    key = jax.random.PRNGKey(0)

    # Primary case (small shapes consistent with the module).
    N, C, H, W = 2, 4, 16, 16
    x = jax.random.normal(key, (N, C, H, W), dtype=jnp.float32)
    out = jax.block_until_ready(channel_pool(x))
    ref = channel_pool_ref(x)
    assert out.shape == (N, 1, H, W), out.shape
    assert jnp.allclose(out, ref, atol=1e-5, rtol=1e-5), "mismatch vs reference"

    # Second case exercising the C > 8 chunked single-pass reduction path.
    x2 = jax.random.normal(jax.random.PRNGKey(0), (2, 12, 16, 16), dtype=jnp.float32)
    out2 = jax.block_until_ready(channel_pool(x2))
    ref2 = channel_pool_ref(x2)
    assert jnp.allclose(out2, ref2, atol=1e-5, rtol=1e-5), "mismatch vs reference (C=12)"

    print("KERNEL_OK")
</pallas_src>

<mosaic_0001>
module attributes {stable_mosaic.version = 11 : i64} {
  func.func @_channel_pool_kernel(%arg0: i32, %arg1: i32, %arg2: memref<1x4x256xf32, #tpu.memory_space<vmem>>, %arg3: memref<1x1x256xf32, #tpu.memory_space<vmem>>) attributes {dimension_semantics = [#tpu.dimension_semantics<parallel>, #tpu.dimension_semantics<parallel>], iteration_bounds = array<i64: 2, 1>, scalar_prefetch = 0 : i64, scratch_operands = 0 : i64, tpu.core_type = #tpu.core_type<tc>, window_params = [{transform_indices = @transform_0, window_bounds = array<i64: 1, 4, 256>}, {transform_indices = @transform_1, window_bounds = array<i64: 1, 1, 256>}]} {
    %c0 = arith.constant 0 : index
    %c0_0 = arith.constant 0 : index
    %c0_1 = arith.constant 0 : index
    %0 = vector.load %arg2[%c0, %c0_0, %c0_1] : memref<1x4x256xf32, #tpu.memory_space<vmem>>, vector<1x4x256xf32>
    %1 = vector.shape_cast %0 : vector<1x4x256xf32> to vector<4x256xf32>
    %cst = arith.constant dense<0.000000e+00> : vector<256xf32>
    %2 = vector.multi_reduction <add>, %1, %cst [0] : vector<4x256xf32> to vector<256xf32>
    %3 = vector.shape_cast %2 : vector<256xf32> to vector<1x256xf32>
    %cst_2 = arith.constant dense<0xFF800000> : vector<256xf32>
    %4 = vector.multi_reduction <maximumf>, %1, %cst_2 [0] : vector<4x256xf32> to vector<256xf32>
    %5 = vector.shape_cast %4 : vector<256xf32> to vector<1x256xf32>
    %cst_3 = arith.constant 2.500000e-01 : f32
    %6 = vector.broadcast %cst_3 : f32 to vector<1x256xf32>
    %7 = arith.mulf %3, %6 : vector<1x256xf32>
    %8 = arith.addf %7, %5 : vector<1x256xf32>
    %c0_4 = arith.constant 0 : index
    %c0_5 = arith.constant 0 : index
    %c0_6 = arith.constant 0 : index
    %9 = vector.load %arg3[%c0_4, %c0_5, %c0_6] : memref<1x1x256xf32, #tpu.memory_space<vmem>>, vector<1x1x256xf32>
    %10 = vector.shape_cast %9 : vector<1x1x256xf32> to vector<1x256xf32>
    %11 = vector.shape_cast %8 : vector<1x256xf32> to vector<1x1x256xf32>
    tpu.vector_store %arg3[%c0_4, %c0_5, %c0_6], %11 {strides = array<i32>} : memref<1x1x256xf32, #tpu.memory_space<vmem>>, vector<1x1x256xf32>,
    return
  }
  func.func @transform_0(%arg0: i32, %arg1: i32) -> (i32, i32, i32) {
    %c0_i32 = arith.constant 0 : i32
    %c0_i32_0 = arith.constant 0 : i32
    return %arg0, %c0_i32, %arg1 : i32, i32, i32
  }
  func.func @transform_1(%arg0: i32, %arg1: i32) -> (i32, i32, i32) {
    %c0_i32 = arith.constant 0 : i32
    %c0_i32_0 = arith.constant 0 : i32
    return %arg0, %c0_i32, %arg1 : i32, i32, i32
  }
}

</mosaic_0001>

<llo_original>
// kernel: tpu_custom_call.1
$region0: #{tpu_custom_call.1}
  #allocation0 [shape = 'u32[]', space=smem, size = 0x4, offset = 0x4, fixed_abs, tag = 'smem constant byte address 0x4 - core index']
  #allocation1 [shape = 'u32[144,128]{1,0:T(1,128)}', space=vmem, size = 0x12000, scoped, tag = 'internal scratch']
  %s0 = inlined_call_operand.hbm [shape: f32[2,4,256], index: 0, kind: input, shape index: {}]
  %s1 = inlined_call_operand.hbm [shape: f32[2,1,256], index: 1, kind: output, shape index: {}]
  %s2 = sld [smem:[#allocation0]]
  $region41: #{tpu_custom_call.1} parent=0
    _
  %s4 = ssub.s32 1, %s2
  %s5 = scalar_select 0, %s4, %s2
  $region1: #{tpu_custom_call.1} parent=0
    #allocation2 [shape = 'u8[8192]{0}', space=vmem, size = 0x2000, scoped, tag = 'input window, operand 0']
    #allocation3 [shape = 's32[2]{0}', space=sflag, size = 0x8, scoped, tag = 'scoped memory for tpu_custom_call.1']
    #allocation4 [shape = 's32[2]{0}', space=sflag, size = 0x8, scoped, tag = 'scoped memory for tpu_custom_call.1']
    #allocation5 [shape = 'u8[2048]{0}', space=vmem, size = 0x800, scoped, tag = 'output window, operand 0']
    %6 = vsyncpa [#allocation3], 0
    %s7 = scalar_lea.sflag [#allocation3], 1
    %8 = vsyncpa %s7, 0
    %9 = vsyncpa [#allocation4], 0
    %s10 = scalar_lea.sflag [#allocation4], 1
    %11 = vsyncpa %s10, 0
    loop: start=0, step=1, limit=4
    $region2: #{tpu_custom_call.1} parent=1 // loop_pre_header
      _
    $region3: #{tpu_custom_call.1} parent=1 // loop_header
      %s13 = sphi 0, %s17
      %p14 = scmp.ge.s32.totalorder %s13, 4
      %s20 = sphi 0, %s32
      %s21 = sphi 0, %s28
      %s22 = sphi 0, %s20
      %s23 = sphi 0, %s21
      %s24 = sphi 0, %s22
      %s25 = sphi 0, %s23
      %s37 = sphi 0, %s39
      %s40 = sphi 0, %s37
      %s41 = sphi 0, %s40
      %s57 = sphi 0, %s41
      %s65 = sphi 0, %s67
      %s68 = sphi 0, %s65
      %s69 = sphi 0, %s68
      %s85 = sphi 0, %s69
    $region4: #{tpu_custom_call.1} parent=1 // loop_header_branch
      %16 = sbr.rel (%p14) target = $region8
    $region5: #{tpu_custom_call.1} parent=1 // loop_body
      %s18 = ssub.s32 %s13, 1
      %s19 = ssub.s32 %s13, 2
      %s26 = sadd.s32 1, %s21
      %p27 = scmp.ge.s32.totalorder %s26, 1
      %s28 = scalar_select %p27, 0, %s26
      %s29 = sadd.s32 1, %s20
      %s30 = scalar_select %p27, %s29, %s20
      %p31 = scmp.ge.s32.totalorder %s30, 2
      %s32 = scalar_select %p31, 0, %s30
      %s33 = ssub.s32 %s20, %s32
      %s34 = ssub.s32 %s21, %s28
      %s35 = sor.u32 %s33, %s34
      %p36 = scmp.eq.s32.totalorder %s35, 0
      %s38 = sadd.s32 %s37, 1
      %s39 = scalar_select %p36, %s37, %s38
      %p42 = pneg %p36
      %p43 = scmp.eq.s32.totalorder %s13, 1
      %p44 = por %p42, %p43
      %p45 = scmp.ne.s32.totalorder %s37, %s40
      %p46 = scmp.eq.s32.totalorder %s13, 0
      %p47 = por %p45, %p46
      %p48 = scmp.ne.s32.totalorder %s37, %s40
      %p49 = scmp.eq.s32.totalorder %s18, 1
      %p50 = por %p48, %p49
      %p51 = scmp.ne.s32.totalorder %s40, %s41
      %p52 = scmp.eq.s32.totalorder %s18, 0
      %p53 = por %p51, %p52
      %p54 = scmp.ne.s32.totalorder %s40, %s41
      %p55 = scmp.eq.s32.totalorder %s19, 1
      %p56 = por %p54, %p55
      %p58 = scmp.ne.s32.totalorder %s41, %s57
      %p59 = scmp.eq.s32.totalorder %s19, 0
      %p60 = por %p58, %p59
      %s61 = ssub.s32 %s20, %s32
      %s62 = ssub.s32 %s21, %s28
      %s63 = sor.u32 %s61, %s62
      %p64 = scmp.eq.s32.totalorder %s63, 0
      %s66 = sadd.s32 %s65, 1
      %s67 = scalar_select %p64, %s65, %s66
      %p70 = pneg %p64
      %p71 = scmp.eq.s32.totalorder %s13, 1
      %p72 = por %p70, %p71
      %p73 = scmp.ne.s32.totalorder %s65, %s68
      %p74 = scmp.eq.s32.totalorder %s13, 0
      %p75 = por %p73, %p74
      %p76 = scmp.ne.s32.totalorder %s65, %s68
      %p77 = scmp.eq.s32.totalorder %s18, 1
      %p78 = por %p76, %p77
      %p79 = scmp.ne.s32.totalorder %s68, %s69
      %p80 = scmp.eq.s32.totalorder %s18, 0
      %p81 = por %p79, %p80
      %p82 = scmp.ne.s32.totalorder %s68, %s69
      %p83 = scmp.eq.s32.totalorder %s19, 1
      %p84 = por %p82, %p83
      %p86 = scmp.ne.s32.totalorder %s69, %s85
      %p87 = scmp.eq.s32.totalorder %s19, 0
      %p88 = por %p86, %p87
      %p89 = scmp.le.s32.totalorder 1, %s13
      %p90 = scmp.lt.s32.totalorder %s13, 3
      %p91 = pnand %p89, %p90
      %p92 = pneg %p91
      // Predicated region
      $region9: #{tpu_custom_call.1} parent=5 // pred_check
        _
      $region10: #{tpu_custom_call.1} parent=5 // pred_check_branch
        %94 = sbr.rel (%p91) target = $region12
      $region11: #{tpu_custom_call.1} parent=5 // pred_region
        %s95 = ssub.s32 %s13, 1
      $region12: #{tpu_custom_call.1} parent=5 // pred_fallthru
        _
      %p96 = scmp.lt.s32.totalorder %s13, 2
      // Predicated region
      $region13: #{tpu_custom_call.1} parent=5 // pred_check
        %p97 = pneg %p96
      $region14: #{tpu_custom_call.1} parent=5 // pred_check_branch
        %99 = sbr.rel (%p97) target = $region16
      $region15: #{tpu_custom_call.1} parent=5 // pred_region
        // Predicated region
        $region17: #{tpu_custom_call.1} parent=15 // pred_check
          %p100 = pneg %p47
        $region18: #{tpu_custom_call.1} parent=15 // pred_check_branch
          %102 = sbr.rel (%p100) target = $region20
        $region19: #{tpu_custom_call.1} parent=15 // pred_region
          %s103 = sand.u32 %s37, 1
          %s104 = scalar_lea.sflag [#allocation3], %s103
          %s105 = sand.u32 %s37, 1
          %s106 = smul.addr %s105, 8
          %s107 = scalar_lea.vmem [#allocation2], %s106
          %s108 = smul.u32 2, %s21
          %s110 = ssub.s32 128, 128
          %111 = vsyncadd %s104, %s110
          %s112 = smul.addr %s20, 2
          %s113 = sadd.s32 %s108, %s112
          %s114 = smul.addr %s113, 64
          %s115 = scalar_lea.hbm %s0, %s114
          %s117 = sshll.u32 %s107, 4
          %s118 = int_to_ptr.vmem [resolvable:$true] %s117
          %120 = dma.hbm_to_vmem [thread:$0]  %s115, 128, %s118, %s104
        $region20: #{tpu_custom_call.1} parent=15 // pred_fallthru
          _
      $region16: #{tpu_custom_call.1} parent=5 // pred_fallthru
        _
      %p121 = scmp.le.s32.totalorder 1, %s13
      %p122 = scmp.lt.s32.totalorder %s13, 3
      %p123 = pnand %p121, %p122
      %p124 = pneg %p123
      // Predicated region
      $region21: #{tpu_custom_call.1} parent=5 // pred_check
        _
      $region22: #{tpu_custom_call.1} parent=5 // pred_check_branch
        %126 = sbr.rel (%p123) target = $region24
      $region23: #{tpu_custom_call.1} parent=5 // pred_region
        %s127 = ssub.s32 %s13, 1
        %s128 = sand.u32 %s40, 1
        %s129 = scalar_lea.sflag [#allocation3], %s128
        %s130 = sand.u32 %s40, 1
        %s131 = smul.addr %s130, 8
        %s132 = scalar_lea.vmem [#allocation2], %s131
        // Predicated region
        $region25: #{tpu_custom_call.1} parent=23 // pred_check
          %p133 = pneg %p53
        $region26: #{tpu_custom_call.1} parent=23 // pred_check_branch
          %135 = sbr.rel (%p133) target = $region28
        $region27: #{tpu_custom_call.1} parent=23 // pred_region
          %136 = dma.done %s129, 128
        $region28: #{tpu_custom_call.1} parent=23 // pred_fallthru
          _
        %s137 = sand.u32 %s40, 1
        %s138 = scalar_lea.sflag [#allocation3], %s137
        %s139 = sand.u32 %s40, 1
        %s140 = smul.addr %s139, 8
        %s141 = scalar_lea.vmem [#allocation2], %s140
        %p142 = pneg %p53
        %p143 = pneg %p50
        %p144 = pneg %p81
        %p145 = pneg %p78
        %s146 = sand.u32 %s68, 1
        %s147 = scalar_lea.sflag [#allocation4], %s146
        %s148 = sand.u32 %s68, 1
        %s149 = smul.addr %s148, 2
        %s150 = scalar_lea.vmem [#allocation5], %s149
        %s151 = smul.u32 2, %s23
        %s152 = smul.u32 2, %s23
        %v153 = vld [vmem:[%s132] sm:$0xff]
        %v155 = vcombine.high %v153, %v153
        %vm157 = vcmask 1043456
        %v158 = vsel %vm157, %v153, 0.0
        %v159 = vrot.slane %v158, 4
        %v160 = vadd.f32 %v158, %v159
        %v161 = vrot.slane %v160, 2
        %v162 = vadd.f32 %v160, %v161
        %v163 = vrot.slane %v162, 1
        %v164 = vadd.f32 %v162, %v163
        %v165 = vsel %vm157, %v155, 0.0
        %v166 = vrot.slane %v165, 4
        %v167 = vadd.f32 %v165, %v166
        %v168 = vrot.slane %v167, 2
        %v169 = vadd.f32 %v167, %v168
        %v170 = vrot.slane %v169, 1
        %v171 = vadd.f32 %v169, %v170
        %v172 = vsel %vm157, %v153, -inf
        %v173 = vrot.slane %v172, 4
        %v174 = vmax.f32 %v172, %v173
        %v175 = vrot.slane %v174, 2
        %v176 = vmax.f32 %v174, %v175
        %v177 = vrot.slane %v176, 1
        %v178 = vmax.f32 %v176, %v177
        %v179 = vsel %vm157, %v155, -inf
        %v180 = vrot.slane %v179, 4
        %v181 = vmax.f32 %v179, %v180
        %v182 = vrot.slane %v181, 2
        %v183 = vmax.f32 %v181, %v182
        %v184 = vrot.slane %v183, 1
        %v185 = vmax.f32 %v183, %v184
        %v186 = vmul.f32 %v164, 0.25
        %v187 = vmul.f32 %v171, 0.25
        %v188 = vadd.f32 %v186, %v178
        %v189 = vadd.f32 %v187, %v185
        %v192 = vcombine.low %v188, %v189
        %v194 = vunpack.c.l.s4 1966171168
        %v195 = vunpack.c.0.s8 %v194
        %v196 = vlaneseq
        %v197 = vshrl.u32 %v196, 7
        %v198 = vsub.s32 %v195, %v197
        %v199 = vrot.slane %v192, %v198
        %v201 = vunpack.c.l.s4 1966171168
        %v202 = vunpack.c.0.s8 %v201
        %v203 = vlaneseq
        %v204 = vshrl.u32 %v203, 7
        %v205 = vsub.s32 %v202, %v204
        %v206 = vrot.slane %v199, %v205
        %v208 = vlaneseq
        %vm209 = vcmp.ge.s32.totalorder %v208, 0
        %vm210 = vcmp.lt.s32.totalorder %v208, 256
        %vm211 = vmand %vm209, %vm210
        %212 = vst.msk [vmem:[%s150] sm:$0x3] %vm211, %v206
        %s213 = sand.u32 %s68, 1
        %s214 = scalar_lea.sflag [#allocation4], %s213
        %s215 = sand.u32 %s68, 1
        %s216 = smul.addr %s215, 2
        %s217 = scalar_lea.vmem [#allocation5], %s216
        // Predicated region
        $region29: #{tpu_custom_call.1} parent=23 // pred_check
          %p218 = pneg %p78
        $region30: #{tpu_custom_call.1} parent=23 // pred_check_branch
          %220 = sbr.rel (%p218) target = $region32
        $region31: #{tpu_custom_call.1} parent=23 // pred_region
          %s221 = smul.u32 2, %s23
          %s223 = ssub.s32 32, 32
          %224 = vsyncadd %s214, %s223
          %s225 = smul.addr %s22, 2
          %s226 = sadd.s32 %s221, %s225
          %s227 = smul.addr %s226, 16
          %s228 = scalar_lea.hbm %s1, %s227
          %s230 = sshll.u32 %s217, 4
          %s231 = int_to_ptr.vmem [resolvable:$true] %s230
          %233 = dma.vmem_to_hbm [thread:$0]  %s231, 32, %s228, %s214
        $region32: #{tpu_custom_call.1} parent=23 // pred_fallthru
          _
      $region24: #{tpu_custom_call.1} parent=5 // pred_fallthru
        _
      %p234 = scmp.le.s32.totalorder 2, %s13
      // Predicated region
      $region33: #{tpu_custom_call.1} parent=5 // pred_check
        %p235 = pneg %p234
      $region34: #{tpu_custom_call.1} parent=5 // pred_check_branch
        %237 = sbr.rel (%p235) target = $region36
      $region35: #{tpu_custom_call.1} parent=5 // pred_region
        %s238 = ssub.s32 %s13, 2
        // Predicated region
        $region37: #{tpu_custom_call.1} parent=35 // pred_check
          %p239 = pneg %p84
        $region38: #{tpu_custom_call.1} parent=35 // pred_check_branch
          %241 = sbr.rel (%p239) target = $region40
        $region39: #{tpu_custom_call.1} parent=35 // pred_region
          %s242 = sand.u32 %s69, 1
          %s243 = scalar_lea.sflag [#allocation4], %s242
          %s244 = sand.u32 %s69, 1
          %s245 = smul.addr %s244, 2
          %s246 = scalar_lea.vmem [#allocation5], %s245
          %247 = dma.done %s243, 32
        $region40: #{tpu_custom_call.1} parent=35 // pred_fallthru
          _
      $region36: #{tpu_custom_call.1} parent=5 // pred_fallthru
        _
    $region6: #{tpu_custom_call.1} parent=1 // loop_footer
      %s17 = sadd.s32 1, %s13
    $region7: #{tpu_custom_call.1} parent=1 // loop_footer_branch
      %12 = sbr.rel target = $region3
    $region8: #{tpu_custom_call.1} parent=1 // loop_exit
      _
    %248 = vsyncpa [#allocation3], 1
    %s249 = scalar_lea.sflag [#allocation3], 1
    %250 = vsyncpa %s249, 1
    %251 = vsyncpa [#allocation4], 1
    %s252 = scalar_lea.sflag [#allocation4], 1
    %253 = vsyncpa %s252, 1

</llo_original>
